<compile_context>
chip_gen: v6e
topology: v6e:2x2x1
jax: 0.10.0
libtpu: 0.0.40
codegen_flags: <defaults>
</compile_context>

<pallas_src>
import jax
import jax.numpy as jnp
from jax.experimental import pallas as pl
from jax.experimental.pallas import tpu as pltpu

POS_MAP = {'@@PADDING@@': 0, 'n': 1, 'v': 2, 'a': 3, 'r': 4, 's': 5,
           '@@MASK@@': 6, '@@NULL@@': 7, '@@UNKNOWN@@': 8}

_TAB_ROWS = 16       # one-hot matmul K dim (multiple of 8; >= 10 used rows)
_NULL_SLOT = 9       # table row holding the learned null embedding


def _round_up(x, m):
    return (x + m - 1) // m * m


# ----------------------------- Pallas kernel ------------------------------ #
def _proj_kernel(sel_ref, ent_ref, w_ent_ref, tab_ref, out_ref):
    """out = where(null, 0, ent @ W_ent) + onehot(sel) @ table   (f32 accum)."""
    tile_rows = sel_ref.shape[0]
    sel = sel_ref[...]                                           # (T, 1) int32

    # Dominant MXU matmul on the gathered pretrained entity embeddings.
    proj = jnp.dot(ent_ref[...], w_ent_ref[...],
                   preferred_element_type=jnp.float32)           # (T, ED) f32

    # POS projection + bias (+ null embedding) via a one-hot matmul against the
    # tiny grid-invariant table.  The kernel is HBM-bound, so this extra MXU
    # pass is free slack and replaces a full (n, entity_dim) HBM stream.
    iota = jax.lax.broadcasted_iota(jnp.int32, (tile_rows, _TAB_ROWS), 1)
    onehot = (sel == iota).astype(jnp.float32)                   # (T, 16) f32
    add = jnp.dot(onehot, tab_ref[...],
                  preferred_element_type=jnp.float32)            # (T, ED) f32

    # @@NULL@@ rows: drop the projection; table row 9 already contributes the
    # learned null embedding, reproducing `out[null_mask] = null_embedding`.
    is_null = sel == _NULL_SLOT                                  # (T, 1) bool
    out = jnp.where(is_null, 0.0, proj) + add

    # TODO(synk): torch.nn.Dropout is identity in eval mode; training-mode
    # stochastic dropout is not reproduced here.
    out_ref[...] = out.astype(out_ref.dtype)


def wordnet_all_embedding_forward(entity_ids, params, *, tile_rows=2048,
                                  compute_dtype=jnp.float32,
                                  out_dtype=jnp.float32):
    """entity_ids: (B, C, E) int32 -> (B, C, E, entity_dim) out_dtype."""
    B, C, E = entity_ids.shape
    ent_dim = params['entity_emb'].shape[1]
    entity_dim = params['w_ent'].shape[1]
    num_pos = len(POS_MAP)          # 9 reachable POS indices

    n = B * C * E
    # Big row tiles amortize the ~0.35us/step pipeline overhead and fill the
    # MXU sublane dim; clamp for tiny inputs, then make sure there are >= 2
    # grid steps whenever possible so both v7x TensorCores get work.
    tile_rows = max(8, min(_round_up(int(tile_rows), 8), _round_up(n, 8)))
    if n > 8 and _round_up(n, tile_rows) // tile_rows < 2:
        tile_rows = max(8, _round_up((n + 1) // 2, 8))
    n_pad = _round_up(n, tile_rows)

    # Pad only the tiny int32 id vector (pad id 0 = @@PADDING@@); padded rows
    # are sliced off at the end.
    flat_ids = jnp.pad(entity_ids.reshape(n), (0, n_pad - n))

    # ----------------------- XLA-side glue (gathers) ------------------------
    # Dominant stream: per-position pretrained entity embeddings.  Gather in
    # the table's stored dtype and cast the gathered result so the full vocab
    # is never re-cast / re-written per call (bf16 path: gather+convert fuse).
    ent = params['entity_emb'][flat_ids].astype(compute_dtype)   # (n_pad, D_ent)
    # TODO(synk): for small vocabs the gather could be skipped by keeping the
    # vocab table VMEM-resident and gathering in-kernel, and heavy id
    # repetition could be deduped before the gather; not done here.

    # Tiny grid-invariant select table (~8 KB, f32 for tight numerics):
    # rows 0..8 = pos projection (+bias), row 9 = null embedding, 10..15 = 0.
    pos_proj = (params['pos_emb'][:num_pos] @ params['w_pos']
                + params['b'])                                   # (9, ED)
    tab = jnp.zeros((_TAB_ROWS, entity_dim), jnp.float32)
    tab = tab.at[:num_pos].set(pos_proj.astype(jnp.float32))
    tab = tab.at[_NULL_SLOT].set(params['null_embedding'].astype(jnp.float32))

    # Per-row select column (4 B/row of HBM traffic): pos index, or _NULL_SLOT
    # for @@NULL@@ rows.  Null-ness comes from the entity id (exact semantics).
    pos_idx = params['entity_id_to_pos_index'][flat_ids].astype(jnp.int32)
    is_null = flat_ids == params['null_id']
    sel = jnp.where(is_null, jnp.int32(_NULL_SLOT), pos_idx).reshape(n_pad, 1)

    w_ent = params['w_ent'].astype(compute_dtype)                # (D_ent, ED)

    # entity_dim = 128 keeps the output lane-dense (unmasked vst).
    grid_spec = pltpu.PrefetchScalarGridSpec(
        num_scalar_prefetch=0,
        grid=(n_pad // tile_rows,),
        in_specs=[
            pl.BlockSpec((tile_rows, 1), lambda i: (i, 0)),            # sel
            pl.BlockSpec((tile_rows, ent_dim), lambda i: (i, 0)),      # ent
            pl.BlockSpec((ent_dim, entity_dim), lambda i: (0, 0)),     # W_ent
            pl.BlockSpec((_TAB_ROWS, entity_dim), lambda i: (0, 0)),   # table
        ],
        out_specs=pl.BlockSpec((tile_rows, entity_dim), lambda i: (i, 0)),
    )

    out = pl.pallas_call(
        _proj_kernel,
        out_shape=jax.ShapeDtypeStruct((n_pad, entity_dim), out_dtype),
        grid_spec=grid_spec,
        compiler_params=pltpu.CompilerParams(
            dimension_semantics=("parallel",),      # megacore-shardable (v7x)
            vmem_limit_bytes=32 * 1024 * 1024),     # <7 MB used at tile=2048
    )(sel, ent, w_ent, tab)

    return out[:n].reshape(B, C, E, entity_dim)


# -------------------------- deterministic params --------------------------- #
def init_params(key, *, num_entities, ent_emb_dim, pos_emb_dim, entity_dim):
    k1, k2, k3, k4, k5 = jax.random.split(key, 5)
    # "pretrained" entity embeddings (padding_idx=0 row zeroed)
    entity_emb = jax.random.normal(k1, (num_entities, ent_emb_dim), jnp.float32)
    entity_emb = entity_emb.at[0].set(0.0)
    # pos embeddings (init_bert_weights: normal std 0.02); table sized
    # len(entities) exactly as in the PyTorch module.
    pos_emb = 0.02 * jax.random.normal(k2, (num_entities, pos_emb_dim),
                                       jnp.float32)
    # proj_feed_forward: weight normal(0.02), bias zero
    concat_dim = ent_emb_dim + pos_emb_dim
    w = 0.02 * jax.random.normal(k3, (concat_dim, entity_dim), jnp.float32)
    b = jnp.zeros((1, entity_dim), jnp.float32)
    null_embedding = 0.02 * jax.random.normal(k4, (entity_dim,), jnp.float32)

    # entity_id_to_pos_index buffer: synsets get a random POS in {n,v,a,r,s},
    # specials get their dedicated POS_MAP slots.
    pos_index = jax.random.randint(k5, (num_entities,), 1, 6, dtype=jnp.int32)
    mask_id, null_id, unk_id = num_entities - 3, num_entities - 2, num_entities - 1
    pos_index = pos_index.at[0].set(POS_MAP['@@PADDING@@'])
    pos_index = pos_index.at[mask_id].set(POS_MAP['@@MASK@@'])
    pos_index = pos_index.at[null_id].set(POS_MAP['@@NULL@@'])
    pos_index = pos_index.at[unk_id].set(POS_MAP['@@UNKNOWN@@'])

    return dict(
        entity_emb=entity_emb,
        pos_emb=pos_emb,
        entity_id_to_pos_index=pos_index,
        w_ent=w[:ent_emb_dim],
        w_pos=w[ent_emb_dim:],
        b=b,
        null_embedding=null_embedding,
        null_id=jnp.int32(null_id),
    )


# ------------------------------- reference --------------------------------- #
def reference_forward(entity_ids, params):
    flat = entity_ids.reshape(-1)
    ent = params['entity_emb'][flat]
    pos = params['pos_emb'][params['entity_id_to_pos_index'][flat]]
    cat = jnp.concatenate([ent, pos], axis=-1)
    w = jnp.concatenate([params['w_ent'], params['w_pos']], axis=0)
    out = cat @ w + params['b']
    out = jnp.where((flat == params['null_id'])[:, None],
                    params['null_embedding'][None, :], out)
    return out.reshape(entity_ids.shape + (out.shape[-1],))


if __name__ == "__main__":
    B, C, E = 2, 4, 8            # batch, num_candidates, num_entities-per-cand
    NUM_ENTITIES = 64            # vocab size (incl. specials)
    ENT_EMB_DIM = 128            # pretrained entity embedding dim
    POS_EMB_DIM = 25             # module default pos_embedding_dim
    ENTITY_DIM = 128             # output entity_dim

    key = jax.random.PRNGKey(0)
    kp, kx = jax.random.split(key)
    params = init_params(kp, num_entities=NUM_ENTITIES, ent_emb_dim=ENT_EMB_DIM,
                         pos_emb_dim=POS_EMB_DIM, entity_dim=ENTITY_DIM)

    entity_ids = jax.random.randint(kx, (B, C, E), 0, NUM_ENTITIES,
                                    dtype=jnp.int32)
    # Make sure padding and null ids are exercised.
    entity_ids = entity_ids.at[0, 0, 0].set(0)
    entity_ids = entity_ids.at[0, 0, 1].set(int(params['null_id']))

    ref = reference_forward(entity_ids, params)

    # f32 operand path (matches reference tightly).
    out = wordnet_all_embedding_forward(entity_ids, params)
    out = jax.block_until_ready(out)
    assert out.shape == (B, C, E, ENTITY_DIM), out.shape
    assert jnp.allclose(out, ref, atol=1e-5, rtol=1e-5), "f32 mismatch vs reference"

    # bf16 operand path (halves the dominant HBM stream / MXU passes, f32
    # accumulation, POS/null table kept f32).
    out_bf16 = wordnet_all_embedding_forward(entity_ids, params,
                                             compute_dtype=jnp.bfloat16)
    out_bf16 = jax.block_until_ready(out_bf16)
    assert jnp.allclose(out_bf16, ref, atol=5e-2, rtol=5e-2), \
        "bf16 mismatch vs reference"

    print("KERNEL_OK")
</pallas_src>

<mosaic_0001>
module attributes {stable_mosaic.version = 11 : i64} {
  func.func @_proj_kernel(%arg0: i32, %arg1: memref<32x1xi32, #tpu.memory_space<vmem>>, %arg2: memref<32x128xf32, #tpu.memory_space<vmem>>, %arg3: memref<128x128xf32, #tpu.memory_space<vmem>>, %arg4: memref<16x128xf32, #tpu.memory_space<vmem>>, %arg5: memref<32x128xf32, #tpu.memory_space<vmem>>) attributes {dimension_semantics = [#tpu.dimension_semantics<parallel>], iteration_bounds = array<i64: 2>, scalar_prefetch = 0 : i64, scratch_operands = 0 : i64, tpu.core_type = #tpu.core_type<tc>, window_params = [{transform_indices = @transform_0, window_bounds = array<i64: 32, 1>}, {transform_indices = @transform_1, window_bounds = array<i64: 32, 128>}, {pipeline_mode = #tpu.pipeline_mode<synchronous>, transform_indices = @transform_2, window_bounds = array<i64: 128, 128>}, {pipeline_mode = #tpu.pipeline_mode<synchronous>, transform_indices = @transform_3, window_bounds = array<i64: 16, 128>}, {transform_indices = @transform_4, window_bounds = array<i64: 32, 128>}]} {
    %c0 = arith.constant 0 : index
    %c0_0 = arith.constant 0 : index
    %0 = vector.load %arg1[%c0, %c0_0] : memref<32x1xi32, #tpu.memory_space<vmem>>, vector<32x1xi32>
    %c0_1 = arith.constant 0 : index
    %c0_2 = arith.constant 0 : index
    %1 = vector.load %arg2[%c0_1, %c0_2] : memref<32x128xf32, #tpu.memory_space<vmem>>, vector<32x128xf32>
    %c0_3 = arith.constant 0 : index
    %c0_4 = arith.constant 0 : index
    %2 = vector.load %arg3[%c0_3, %c0_4] : memref<128x128xf32, #tpu.memory_space<vmem>>, vector<128x128xf32>
    %cst = arith.constant dense<0.000000e+00> : vector<32x128xf32>
    %3 = tpu.matmul %1, %2, %cst {dimension_numbers = #tpu.dot_dimension_numbers<[1], [0], [0], [1], [0, 0, 1, 1], [], []>} : vector<32x128xf32>, vector<128x128xf32>, vector<32x128xf32> -> vector<32x128xf32>
    %4 = tpu.iota {dimensions = array<i32: 1>} : vector<32x16xi32>
    %5 = vector.broadcast %0 : vector<32x1xi32> to vector<32x16xi32>
    %6 = arith.cmpi eq, %5, %4 : vector<32x16xi32>
    %7 = arith.extui %6 : vector<32x16xi1> to vector<32x16xi32>
    %8 = arith.sitofp %7 : vector<32x16xi32> to vector<32x16xf32>
    %c0_5 = arith.constant 0 : index
    %c0_6 = arith.constant 0 : index
    %9 = vector.load %arg4[%c0_5, %c0_6] : memref<16x128xf32, #tpu.memory_space<vmem>>, vector<16x128xf32>
    %cst_7 = arith.constant dense<0.000000e+00> : vector<32x128xf32>
    %10 = tpu.matmul %8, %9, %cst_7 {dimension_numbers = #tpu.dot_dimension_numbers<[1], [0], [0], [1], [0, 0, 1, 1], [], []>} : vector<32x16xf32>, vector<16x128xf32>, vector<32x128xf32> -> vector<32x128xf32>
    %c9_i32 = arith.constant 9 : i32
    %11 = vector.broadcast %c9_i32 : i32 to vector<32x1xi32>
    %12 = arith.cmpi eq, %0, %11 : vector<32x1xi32>
    %cst_8 = arith.constant 0.000000e+00 : f32
    %13 = vector.shape_cast %12 : vector<32x1xi1> to vector<32x1xi1>
    %14 = vector.broadcast %13 : vector<32x1xi1> to vector<32x128xi1>
    %15 = vector.broadcast %cst_8 : f32 to vector<32x128xf32>
    %16 = arith.select %14, %15, %3 : vector<32x128xi1>, vector<32x128xf32>
    %17 = arith.addf %16, %10 : vector<32x128xf32>
    %c0_9 = arith.constant 0 : index
    %c0_10 = arith.constant 0 : index
    %18 = vector.load %arg5[%c0_9, %c0_10] : memref<32x128xf32, #tpu.memory_space<vmem>>, vector<32x128xf32>
    tpu.vector_store %arg5[%c0_9, %c0_10], %17 {strides = array<i32>} : memref<32x128xf32, #tpu.memory_space<vmem>>, vector<32x128xf32>,
    return
  }
  func.func @transform_0(%arg0: i32) -> (i32, i32) {
    %c0_i32 = arith.constant 0 : i32
    %c0_i32_0 = arith.constant 0 : i32
    return %arg0, %c0_i32 : i32, i32
  }
  func.func @transform_1(%arg0: i32) -> (i32, i32) {
    %c0_i32 = arith.constant 0 : i32
    %c0_i32_0 = arith.constant 0 : i32
    return %arg0, %c0_i32 : i32, i32
  }
  func.func @transform_2(%arg0: i32) -> (i32, i32) {
    %c0_i32 = arith.constant 0 : i32
    %c0_i32_0 = arith.constant 0 : i32
    %c0_i32_1 = arith.constant 0 : i32
    return %c0_i32, %c0_i32_0 : i32, i32
  }
  func.func @transform_3(%arg0: i32) -> (i32, i32) {
    %c0_i32 = arith.constant 0 : i32
    %c0_i32_0 = arith.constant 0 : i32
    %c0_i32_1 = arith.constant 0 : i32
    return %c0_i32, %c0_i32_0 : i32, i32
  }
  func.func @transform_4(%arg0: i32) -> (i32, i32) {
    %c0_i32 = arith.constant 0 : i32
    %c0_i32_0 = arith.constant 0 : i32
    return %arg0, %c0_i32 : i32, i32
  }
}

</mosaic_0001>

<llo_original>
// kernel: tpu_custom_call.1
$region0: #{tpu_custom_call.1}
  #allocation0 [shape = 'u32[]', space=smem, size = 0x4, offset = 0x4, fixed_abs, tag = 'smem constant byte address 0x4 - core index']
  #allocation1 [shape = 'u32[144,128]{1,0:T(1,128)}', space=vmem, size = 0x12000, scoped, tag = 'internal scratch']
  %s0 = inlined_call_operand.vmem [shape: s32[64,1], index: 0, kind: input, shape index: {}]
  %s1 = inlined_call_operand.vmem [shape: f32[64,128], index: 1, kind: input, shape index: {}]
  %s2 = inlined_call_operand.hbm [shape: f32[128,128], index: 2, kind: input, shape index: {}]
  %s3 = inlined_call_operand.hbm [shape: f32[16,128], index: 3, kind: input, shape index: {}]
  %s4 = inlined_call_operand.hbm [shape: f32[64,128], index: 4, kind: output, shape index: {}]
  %s5 = sld [smem:[#allocation0]]
  $region57: #{tpu_custom_call.1} parent=0
    _
  %s7 = ssub.s32 1, %s5
  %s8 = scalar_select 0, %s7, %s5
  $region1: #{tpu_custom_call.1} parent=0
    #allocation2 [shape = 'u8[65536]{0}', space=vmem, size = 0x10000, scoped, tag = 'input window, operand 2, single buffered']
    #allocation3 [shape = 's32[2]{0}', space=sflag, size = 0x8, scoped, tag = 'scoped memory for tpu_custom_call.1']
    #allocation4 [shape = 's32[2]{0}', space=sflag, size = 0x8, scoped, tag = 'scoped memory for tpu_custom_call.1']
    #allocation5 [shape = 'u8[8192]{0}', space=vmem, size = 0x2000, scoped, tag = 'input window, operand 3, single buffered']
    #allocation6 [shape = 's32[1]{0}', space=sflag, size = 0x4, scoped, tag = 'scoped memory for tpu_custom_call.1']
    #allocation7 [shape = 'u8[32768]{0}', space=vmem, size = 0x8000, scoped, tag = 'output window, operand 0']
    %9 = vsyncpa [#allocation3], 0
    %10 = vsyncpa [#allocation6], 0
    %11 = vsyncpa [#allocation4], 0
    %s12 = scalar_lea.sflag [#allocation4], 1
    %13 = vsyncpa %s12, 0
    loop: start=0, step=1, limit=4
    $region2: #{tpu_custom_call.1} parent=1 // loop_pre_header
      _
    $region3: #{tpu_custom_call.1} parent=1 // loop_header
      %s15 = sphi 0, %s19
      %p16 = scmp.ge.s32.totalorder %s15, 4
      %s25 = sphi 0, %s27
      %s28 = sphi 0, %s25
      %s29 = sphi 0, %s28
      %s45 = sphi 0, %s29
      %s51 = sphi 0, %s53
      %s54 = sphi 0, %s51
      %s55 = sphi 0, %s54
      %s71 = sphi 0, %s55
      %s75 = sphi 0, %s75
      %s77 = sphi 0, %s75
      %s78 = sphi 0, %s77
      %s92 = sphi 0, %s78
      %s96 = sphi 0, %s96
      %s98 = sphi 0, %s96
      %s99 = sphi 0, %s98
      %s113 = sphi 0, %s99
      %s119 = sphi 0, %s121
      %s122 = sphi 0, %s119
      %s123 = sphi 0, %s122
      %s139 = sphi 0, %s123
    $region4: #{tpu_custom_call.1} parent=1 // loop_header_branch
      %18 = sbr.rel (%p16) target = $region8
    $region5: #{tpu_custom_call.1} parent=1 // loop_body
      %s20 = ssub.s32 %s15, 1
      %s21 = ssub.s32 %s15, 2
      %s22 = sadd.s32 %s15, 1
      %s23 = ssub.s32 %s15, %s22
      %p24 = scmp.eq.s32.totalorder %s23, 0
      %s26 = sadd.s32 %s25, 1
      %s27 = scalar_select %p24, %s25, %s26
      %p30 = pneg %p24
      %p31 = scmp.eq.s32.totalorder %s15, 1
      %p32 = por %p30, %p31
      %p33 = scmp.ne.s32.totalorder %s25, %s28
      %p34 = scmp.eq.s32.totalorder %s15, 0
      %p35 = por %p33, %p34
      %p36 = scmp.ne.s32.totalorder %s25, %s28
      %p37 = scmp.eq.s32.totalorder %s20, 1
      %p38 = por %p36, %p37
      %p39 = scmp.ne.s32.totalorder %s28, %s29
      %p40 = scmp.eq.s32.totalorder %s20, 0
      %p41 = por %p39, %p40
      %p42 = scmp.ne.s32.totalorder %s28, %s29
      %p43 = scmp.eq.s32.totalorder %s21, 1
      %p44 = por %p42, %p43
      %p46 = scmp.ne.s32.totalorder %s29, %s45
      %p47 = scmp.eq.s32.totalorder %s21, 0
      %p48 = por %p46, %p47
      %s49 = ssub.s32 %s15, %s22
      %p50 = scmp.eq.s32.totalorder %s49, 0
      %s52 = sadd.s32 %s51, 1
      %s53 = scalar_select %p50, %s51, %s52
      %p56 = pneg %p50
      %p57 = scmp.eq.s32.totalorder %s15, 1
      %p58 = por %p56, %p57
      %p59 = scmp.ne.s32.totalorder %s51, %s54
      %p60 = scmp.eq.s32.totalorder %s15, 0
      %p61 = por %p59, %p60
      %p62 = scmp.ne.s32.totalorder %s51, %s54
      %p63 = scmp.eq.s32.totalorder %s20, 1
      %p64 = por %p62, %p63
      %p65 = scmp.ne.s32.totalorder %s54, %s55
      %p66 = scmp.eq.s32.totalorder %s20, 0
      %p67 = por %p65, %p66
      %p68 = scmp.ne.s32.totalorder %s54, %s55
      %p69 = scmp.eq.s32.totalorder %s21, 1
      %p70 = por %p68, %p69
      %p72 = scmp.ne.s32.totalorder %s55, %s71
      %p73 = scmp.eq.s32.totalorder %s21, 0
      %p74 = por %p72, %p73
      %s76 = sadd.s32 %s75, 1
      %p79 = scmp.eq.s32.totalorder %s15, 1
      %p80 = scmp.ne.s32.totalorder %s75, %s77
      %p81 = scmp.eq.s32.totalorder %s15, 0
      %p82 = por %p80, %p81
      %p83 = scmp.ne.s32.totalorder %s75, %s77
      %p84 = scmp.eq.s32.totalorder %s20, 1
      %p85 = por %p83, %p84
      %p86 = scmp.ne.s32.totalorder %s77, %s78
      %p87 = scmp.eq.s32.totalorder %s20, 0
      %p88 = por %p86, %p87
      %p89 = scmp.ne.s32.totalorder %s77, %s78
      %p90 = scmp.eq.s32.totalorder %s21, 1
      %p91 = por %p89, %p90
      %p93 = scmp.ne.s32.totalorder %s78, %s92
      %p94 = scmp.eq.s32.totalorder %s21, 0
      %p95 = por %p93, %p94
      %s97 = sadd.s32 %s96, 1
      %p100 = scmp.eq.s32.totalorder %s15, 1
      %p101 = scmp.ne.s32.totalorder %s96, %s98
      %p102 = scmp.eq.s32.totalorder %s15, 0
      %p103 = por %p101, %p102
      %p104 = scmp.ne.s32.totalorder %s96, %s98
      %p105 = scmp.eq.s32.totalorder %s20, 1
      %p106 = por %p104, %p105
      %p107 = scmp.ne.s32.totalorder %s98, %s99
      %p108 = scmp.eq.s32.totalorder %s20, 0
      %p109 = por %p107, %p108
      %p110 = scmp.ne.s32.totalorder %s98, %s99
      %p111 = scmp.eq.s32.totalorder %s21, 1
      %p112 = por %p110, %p111
      %p114 = scmp.ne.s32.totalorder %s99, %s113
      %p115 = scmp.eq.s32.totalorder %s21, 0
      %p116 = por %p114, %p115
      %s117 = ssub.s32 %s15, %s22
      %p118 = scmp.eq.s32.totalorder %s117, 0
      %s120 = sadd.s32 %s119, 1
      %s121 = scalar_select %p118, %s119, %s120
      %p124 = pneg %p118
      %p125 = scmp.eq.s32.totalorder %s15, 1
      %p126 = por %p124, %p125
      %p127 = scmp.ne.s32.totalorder %s119, %s122
      %p128 = scmp.eq.s32.totalorder %s15, 0
      %p129 = por %p127, %p128
      %p130 = scmp.ne.s32.totalorder %s119, %s122
      %p131 = scmp.eq.s32.totalorder %s20, 1
      %p132 = por %p130, %p131
      %p133 = scmp.ne.s32.totalorder %s122, %s123
      %p134 = scmp.eq.s32.totalorder %s20, 0
      %p135 = por %p133, %p134
      %p136 = scmp.ne.s32.totalorder %s122, %s123
      %p137 = scmp.eq.s32.totalorder %s21, 1
      %p138 = por %p136, %p137
      %p140 = scmp.ne.s32.totalorder %s123, %s139
      %p141 = scmp.eq.s32.totalorder %s21, 0
      %p142 = por %p140, %p141
      %p143 = scmp.le.s32.totalorder 1, %s15
      %p144 = scmp.lt.s32.totalorder %s15, 3
      %p145 = pnand %p143, %p144
      %p146 = pneg %p145
      // Predicated region
      $region9: #{tpu_custom_call.1} parent=5 // pred_check
        _
      $region10: #{tpu_custom_call.1} parent=5 // pred_check_branch
        %148 = sbr.rel (%p145) target = $region12
      $region11: #{tpu_custom_call.1} parent=5 // pred_region
        %s149 = ssub.s32 %s15, 1
        // Predicated region
        $region13: #{tpu_custom_call.1} parent=11 // pred_check
          %p150 = pneg %p88
        $region14: #{tpu_custom_call.1} parent=11 // pred_check_branch
          %152 = sbr.rel (%p150) target = $region16
        $region15: #{tpu_custom_call.1} parent=11 // pred_region
          %s154 = ssub.s32 2048, 2048
          %155 = vsyncadd [#allocation3], %s154
          %s156 = sshll.u32 [#allocation2], 4
          %s157 = int_to_ptr.vmem [resolvable:$true] %s156
          %162 = dma.hbm_to_vmem [thread:$0]  %s2, 2048, %s157, [#allocation3], 128, 128, 8
        $region16: #{tpu_custom_call.1} parent=11 // pred_fallthru
          _
        // Predicated region
        $region17: #{tpu_custom_call.1} parent=11 // pred_check
          %p163 = pneg %p109
        $region18: #{tpu_custom_call.1} parent=11 // pred_check_branch
          %165 = sbr.rel (%p163) target = $region20
        $region19: #{tpu_custom_call.1} parent=11 // pred_region
          %s167 = ssub.s32 256, 256
          %168 = vsyncadd [#allocation6], %s167
          %s169 = sshll.u32 [#allocation5], 4
          %s170 = int_to_ptr.vmem [resolvable:$true] %s169
          %175 = dma.hbm_to_vmem [thread:$0]  %s3, 256, %s170, [#allocation6], 128, 128, 8
        $region20: #{tpu_custom_call.1} parent=11 // pred_fallthru
          _
      $region12: #{tpu_custom_call.1} parent=5 // pred_fallthru
        _
      %p176 = scmp.lt.s32.totalorder %s15, 2
      // Predicated region
      $region21: #{tpu_custom_call.1} parent=5 // pred_check
        %p177 = pneg %p176
      $region22: #{tpu_custom_call.1} parent=5 // pred_check_branch
        %179 = sbr.rel (%p177) target = $region24
      $region23: #{tpu_custom_call.1} parent=5 // pred_region
        // Predicated region
        $region25: #{tpu_custom_call.1} parent=23 // pred_check
          %p180 = pneg %p35
        $region26: #{tpu_custom_call.1} parent=23 // pred_check_branch
          %182 = sbr.rel (%p180) target = $region28
        $region27: #{tpu_custom_call.1} parent=23 // pred_region
          %s183 = smul.u32 4, %s15
          %p184 = scmp.lt.s32.totalorder %s183, 7
          %s185 = scalar_select %p184, %s183, 7
          %s186 = smul.addr %s185, 8
          %s187 = scalar_lea.vmem %s0, %s186
          %s188 = smul.u32 4, %s15
        $region28: #{tpu_custom_call.1} parent=23 // pred_fallthru
          _
        // Predicated region
        $region29: #{tpu_custom_call.1} parent=23 // pred_check
          %p189 = pneg %p61
        $region30: #{tpu_custom_call.1} parent=23 // pred_check_branch
          %191 = sbr.rel (%p189) target = $region32
        $region31: #{tpu_custom_call.1} parent=23 // pred_region
          %s192 = smul.u32 4, %s15
          %p193 = scmp.lt.s32.totalorder %s192, 7
          %s194 = scalar_select %p193, %s192, 7
          %s195 = smul.addr %s194, 8
          %s196 = scalar_lea.vmem %s1, %s195
          %s197 = smul.u32 4, %s15
        $region32: #{tpu_custom_call.1} parent=23 // pred_fallthru
          _
      $region24: #{tpu_custom_call.1} parent=5 // pred_fallthru
        _
      %p198 = scmp.le.s32.totalorder 1, %s15
      %p199 = scmp.lt.s32.totalorder %s15, 3
      %p200 = pnand %p198, %p199
      %p201 = pneg %p200
      // Predicated region
      $region33: #{tpu_custom_call.1} parent=5 // pred_check
        _
      $region34: #{tpu_custom_call.1} parent=5 // pred_check_branch
        %203 = sbr.rel (%p200) target = $region36
      $region35: #{tpu_custom_call.1} parent=5 // pred_region
        %s204 = ssub.s32 %s15, 1
        // Predicated region
        $region37: #{tpu_custom_call.1} parent=35 // pred_check
          %p205 = pneg %p88
        $region38: #{tpu_custom_call.1} parent=35 // pred_check_branch
          %207 = sbr.rel (%p205) target = $region40
        $region39: #{tpu_custom_call.1} parent=35 // pred_region
          %208 = dma.done [#allocation3], 2048
        $region40: #{tpu_custom_call.1} parent=35 // pred_fallthru
          _
        // Predicated region
        $region41: #{tpu_custom_call.1} parent=35 // pred_check
          %p209 = pneg %p109
        $region42: #{tpu_custom_call.1} parent=35 // pred_check_branch
          %211 = sbr.rel (%p209) target = $region44
        $region43: #{tpu_custom_call.1} parent=35 // pred_region
          %212 = dma.done [#allocation6], 256
        $region44: #{tpu_custom_call.1} parent=35 // pred_fallthru
          _
        %s213 = smul.u32 4, %s20
        %p214 = scmp.lt.s32.totalorder %s213, 7
        %s215 = scalar_select %p214, %s213, 7
        %s216 = smul.addr %s215, 8
        %s217 = scalar_lea.vmem %s0, %s216
        %p218 = pneg %p41
        %p219 = pneg %p38
        %s220 = smul.u32 4, %s20
        %p221 = scmp.lt.s32.totalorder %s220, 7
        %s222 = scalar_select %p221, %s220, 7
        %s223 = smul.addr %s222, 8
        %s224 = scalar_lea.vmem %s1, %s223
        %p225 = pneg %p67
        %p226 = pneg %p64
        %p227 = pneg %p88
        %p228 = pneg %p85
        %p229 = pneg %p109
        %p230 = pneg %p106
        %p231 = pneg %p135
        %p232 = pneg %p132
        %s233 = sand.u32 %s122, 1
        %s234 = scalar_lea.sflag [#allocation4], %s233
        %s235 = sand.u32 %s122, 1
        %s236 = smul.addr %s235, 32
        %s237 = scalar_lea.vmem [#allocation7], %s236
        %s238 = smul.u32 4, %s20
        %p239 = scmp.lt.s32.totalorder %s238, 7
        %s240 = scalar_select %p239, %s238, 7
        %s241 = smul.addr %s240, 8
        %s242 = scalar_lea.vmem %s0, %s241
        %s243 = smul.u32 4, %s20
        %s244 = smul.u32 4, %s20
        %p245 = scmp.lt.s32.totalorder %s244, 7
        %s246 = scalar_select %p245, %s244, 7
        %s247 = smul.addr %s246, 8
        %s248 = scalar_lea.vmem %s1, %s247
        %s249 = smul.u32 4, %s20
        %s250 = smul.u32 4, %s20
        %v251 = vld [vmem:[%s242] sm:$0xff]
        %v252 = vld [vmem:[%s242 + $0x8] sm:$0xff]
        %v253 = vld [vmem:[%s242 + $0x10] sm:$0xff]
        %v254 = vld [vmem:[%s242 + $0x18] sm:$0xff]
        %v255 = vld [vmem:[%s248] sm:$0xff]
        %v256 = vld [vmem:[%s248 + $0x8] sm:$0xff]
        %v257 = vld [vmem:[%s248 + $0x10] sm:$0xff]
        %v258 = vld [vmem:[%s248 + $0x18] sm:$0xff]
        %v259 = vld [vmem:[#allocation2] sm:$0xff]
        %v260 = vld [vmem:[#allocation2 + $0x8] sm:$0xff]
        %v261 = vld [vmem:[#allocation2 + $0x10] sm:$0xff]
        %v262 = vld [vmem:[#allocation2 + $0x18] sm:$0xff]
        %v263 = vld [vmem:[#allocation2 + $0x20] sm:$0xff]
        %v264 = vld [vmem:[#allocation2 + $0x28] sm:$0xff]
        %v265 = vld [vmem:[#allocation2 + $0x30] sm:$0xff]
        %v266 = vld [vmem:[#allocation2 + $0x38] sm:$0xff]
        %v267 = vld [vmem:[#allocation2 + $0x40] sm:$0xff]
        %v268 = vld [vmem:[#allocation2 + $0x48] sm:$0xff]
        %v269 = vld [vmem:[#allocation2 + $0x50] sm:$0xff]
        %v270 = vld [vmem:[#allocation2 + $0x58] sm:$0xff]
        %v271 = vld [vmem:[#allocation2 + $0x60] sm:$0xff]
        %v272 = vld [vmem:[#allocation2 + $0x68] sm:$0xff]
        %v273 = vld [vmem:[#allocation2 + $0x70] sm:$0xff]
        %v274 = vld [vmem:[#allocation2 + $0x78] sm:$0xff]
        %275 = vmatprep.subr.mxu0 0.0
        %276 = vmatpush1.msra.mxu0 %v274
        %277 = vmatprep.subr.mxu0 0.0
        %278 = vmatpush1.msra.mxu0 %v273
        %279 = vmatprep.subr.mxu0 0.0
        %280 = vmatpush1.msra.mxu0 %v272
        %281 = vmatprep.subr.mxu0 0.0
        %282 = vmatpush1.msra.mxu0 %v271
        %283 = vmatprep.subr.mxu0 0.0
        %284 = vmatpush1.msra.mxu0 %v270
        %285 = vmatprep.subr.mxu0 0.0
        %286 = vmatpush1.msra.mxu0 %v269
        %287 = vmatprep.subr.mxu0 0.0
        %288 = vmatpush1.msra.mxu0 %v268
        %289 = vmatprep.subr.mxu0 0.0
        %290 = vmatpush1.msra.mxu0 %v267
        %291 = vmatprep.subr.mxu0 0.0
        %292 = vmatpush1.msra.mxu0 %v266
        %293 = vmatprep.subr.mxu0 0.0
        %294 = vmatpush1.msra.mxu0 %v265
        %295 = vmatprep.subr.mxu0 0.0
        %296 = vmatpush1.msra.mxu0 %v264
        %297 = vmatprep.subr.mxu0 0.0
        %298 = vmatpush1.msra.mxu0 %v263
        %299 = vmatprep.subr.mxu0 0.0
        %300 = vmatpush1.msra.mxu0 %v262
        %301 = vmatprep.subr.mxu0 0.0
        %302 = vmatpush1.msra.mxu0 %v261
        %303 = vmatprep.subr.mxu0 0.0
        %304 = vmatpush1.msra.mxu0 %v260
        %305 = vmatprep.subr.mxu0 0.0
        %306 = vmatpush1.msra.mxu0 %v259
        %307 = vmatprep.subr.mxu0 0.0
        %308 = vmatpush2.msra.mxu0 0.0
        %309 = vmatprep.subr.mxu0 0.0
        %310 = vmatpush2.msra.mxu0 0.0
        %311 = vmatprep.subr.mxu0 0.0
        %312 = vmatpush2.msra.mxu0 0.0
        %313 = vmatprep.subr.mxu0 0.0
        %314 = vmatpush2.msra.mxu0 0.0
        %315 = vmatprep.subr.mxu0 0.0
        %316 = vmatpush2.msra.mxu0 0.0
        %317 = vmatprep.subr.mxu0 0.0
        %318 = vmatpush2.msra.mxu0 0.0
        %319 = vmatprep.subr.mxu0 0.0
        %320 = vmatpush2.msra.mxu0 0.0
        %321 = vmatprep.subr.mxu0 0.0
        %322 = vmatpush2.msra.mxu0 0.0
        %323 = vmatprep.subr.mxu0 0.0
        %324 = vmatpush2.msra.mxu0 0.0
        %325 = vmatprep.subr.mxu0 0.0
        %326 = vmatpush2.msra.mxu0 0.0
        %327 = vmatprep.subr.mxu0 0.0
        %328 = vmatpush2.msra.mxu0 0.0
        %329 = vmatprep.subr.mxu0 0.0
        %330 = vmatpush2.msra.mxu0 0.0
        %331 = vmatprep.subr.mxu0 0.0
        %332 = vmatpush2.msra.mxu0 0.0
        %333 = vmatprep.subr.mxu0 0.0
        %334 = vmatpush2.msra.mxu0 0.0
        %335 = vmatprep.subr.mxu0 0.0
        %336 = vmatpush2.msra.mxu0 0.0
        %337 = vmatprep.subr.mxu0 0.0
        %338 = vmatpush2.msra.mxu0 0.0
        %339 = vmatprep.mubr.f32.mxu0 0.0
        %340 = vmatmul.mubr.f32.gmra.mxu0 %v255
        %v341 = vpop.f32.mrf.mxu0
        %v342 = vadd.f32 0.0, %v341
        %v343 = vpop.f32.mrf.mxu0
        %344 = vmatprep.mubr.f32.mxu0 0.0
        %345 = vmatmul.mubr.f32.gmra.mxu0 %v256
        %v346 = vpop.f32.mrf.mxu0
        %v347 = vadd.f32 0.0, %v346
        %v348 = vpop.f32.mrf.mxu0
        %349 = vmatprep.mubr.f32.mxu0 0.0
        %350 = vmatmul.mubr.f32.gmra.mxu0 %v257
        %v351 = vpop.f32.mrf.mxu0
        %v352 = vadd.f32 0.0, %v351
        %v353 = vpop.f32.mrf.mxu0
        %354 = vmatprep.mubr.f32.mxu0 0.0
        %355 = vmatmul.mubr.f32.gmra.mxu0 %v258
        %v356 = vpop.f32.mrf.mxu0
        %v357 = vadd.f32 0.0, %v356
        %v358 = vpop.f32.mrf.mxu0
        %359 = vdwg.mxu0
        %v360 = vlaneseq
        %v361 = vand.u32 %v360, 127
        %362 = vset.pattern.permute.xlu0 0
        %363 = vperm.xlu0 %362, %v251
        %v364 = vpop.permute.xlu0 %363
        %365 = vset.pattern.permute.xlu0 0
        %366 = vperm.xlu0 %365, %v252
        %v367 = vpop.permute.xlu0 %366
        %368 = vset.pattern.permute.xlu0 0
        %369 = vperm.xlu0 %368, %v253
        %v370 = vpop.permute.xlu0 %369
        %371 = vset.pattern.permute.xlu0 0
        %372 = vperm.xlu0 %371, %v254
        %v373 = vpop.permute.xlu0 %372
        %vm374 = vcmp.eq.s32.totalorder %v364, %v361
        %vm375 = vcmp.eq.s32.totalorder %v367, %v361
        %vm376 = vcmp.eq.s32.totalorder %v370, %v361
        %vm377 = vcmp.eq.s32.totalorder %v373, %v361
        %v378 = vsel %vm374, 1, 0
        %v379 = vsel %vm375, 1, 0
        %v380 = vsel %vm376, 1, 0
        %v381 = vsel %vm377, 1, 0
        %v382 = vcvt.s32.f32 %v378
        %v383 = vcvt.s32.f32 %v379
        %v384 = vcvt.s32.f32 %v380
        %v385 = vcvt.s32.f32 %v381
        %v386 = vld [vmem:[#allocation5] sm:$0xff]
        %v387 = vld [vmem:[#allocation5 + $0x8] sm:$0xff]
        %vm388 = vcmask 130048
        %v390 = vsel %vm388, %v382, 0
        %v393 = vsel %vm388, %v383, 0
        %v396 = vsel %vm388, %v384, 0
        %v399 = vsel %vm388, %v385, 0
        %401 = vmatprep.subr.mxu0 0.0
        %402 = vmatpush1.msra.mxu0 0.0
        %403 = vmatprep.subr.mxu0 0.0
        %404 = vmatpush1.msra.mxu0 0.0
        %405 = vmatprep.subr.mxu0 0.0
        %406 = vmatpush1.msra.mxu0 0.0
        %407 = vmatprep.subr.mxu0 0.0
        %408 = vmatpush1.msra.mxu0 0.0
        %409 = vmatprep.subr.mxu0 0.0
        %410 = vmatpush1.msra.mxu0 0.0
        %411 = vmatprep.subr.mxu0 0.0
        %412 = vmatpush1.msra.mxu0 0.0
        %413 = vmatprep.subr.mxu0 0.0
        %414 = vmatpush1.msra.mxu0 0.0
        %415 = vmatprep.subr.mxu0 0.0
        %416 = vmatpush1.msra.mxu0 0.0
        %417 = vmatprep.subr.mxu0 0.0
        %418 = vmatpush1.msra.mxu0 0.0
        %419 = vmatprep.subr.mxu0 0.0
        %420 = vmatpush1.msra.mxu0 0.0
        %421 = vmatprep.subr.mxu0 0.0
        %422 = vmatpush1.msra.mxu0 0.0
        %423 = vmatprep.subr.mxu0 0.0
        %424 = vmatpush1.msra.mxu0 0.0
        %425 = vmatprep.subr.mxu0 0.0
        %426 = vmatpush1.msra.mxu0 0.0
        %427 = vmatprep.subr.mxu0 0.0
        %428 = vmatpush1.msra.mxu0 0.0
        %429 = vmatprep.subr.mxu0 0.0
        %430 = vmatpush1.msra.mxu0 %v387
        %431 = vmatprep.subr.mxu0 0.0
        %432 = vmatpush1.msra.mxu0 %v386
        %433 = vmatprep.subr.mxu0 0.0
        %434 = vmatpush2.msra.mxu0 0.0
        %435 = vmatprep.subr.mxu0 0.0
        %436 = vmatpush2.msra.mxu0 0.0
        %437 = vmatprep.subr.mxu0 0.0
        %438 = vmatpush2.msra.mxu0 0.0
        %439 = vmatprep.subr.mxu0 0.0
        %440 = vmatpush2.msra.mxu0 0.0
        %441 = vmatprep.subr.mxu0 0.0
        %442 = vmatpush2.msra.mxu0 0.0
        %443 = vmatprep.subr.mxu0 0.0
        %444 = vmatpush2.msra.mxu0 0.0
        %445 = vmatprep.subr.mxu0 0.0
        %446 = vmatpush2.msra.mxu0 0.0
        %447 = vmatprep.subr.mxu0 0.0
        %448 = vmatpush2.msra.mxu0 0.0
        %449 = vmatprep.subr.mxu0 0.0
        %450 = vmatpush2.msra.mxu0 0.0
        %451 = vmatprep.subr.mxu0 0.0
        %452 = vmatpush2.msra.mxu0 0.0
        %453 = vmatprep.subr.mxu0 0.0
        %454 = vmatpush2.msra.mxu0 0.0
        %455 = vmatprep.subr.mxu0 0.0
        %456 = vmatpush2.msra.mxu0 0.0
        %457 = vmatprep.subr.mxu0 0.0
        %458 = vmatpush2.msra.mxu0 0.0
        %459 = vmatprep.subr.mxu0 0.0
        %460 = vmatpush2.msra.mxu0 0.0
        %461 = vmatprep.subr.mxu0 0.0
        %462 = vmatpush2.msra.mxu0 0.0
        %463 = vmatprep.subr.mxu0 0.0
        %464 = vmatpush2.msra.mxu0 0.0
        %465 = vmatprep.mubr.f32.mxu0 0.0
        %466 = vmatmul.mubr.f32.gmra.mxu0 %v390
        %v467 = vpop.f32.mrf.mxu0
        %v468 = vadd.f32 0.0, %v467
        %v469 = vpop.f32.mrf.mxu0
        %470 = vmatprep.mubr.f32.mxu0 0.0
        %471 = vmatmul.mubr.f32.gmra.mxu0 %v393
        %v472 = vpop.f32.mrf.mxu0
        %v473 = vadd.f32 0.0, %v472
        %v474 = vpop.f32.mrf.mxu0
        %475 = vmatprep.mubr.f32.mxu0 0.0
        %476 = vmatmul.mubr.f32.gmra.mxu0 %v396
        %v477 = vpop.f32.mrf.mxu0
        %v478 = vadd.f32 0.0, %v477
        %v479 = vpop.f32.mrf.mxu0
        %480 = vmatprep.mubr.f32.mxu0 0.0
        %481 = vmatmul.mubr.f32.gmra.mxu0 %v399
        %v482 = vpop.f32.mrf.mxu0
        %v483 = vadd.f32 0.0, %v482
        %v484 = vpop.f32.mrf.mxu0
        %485 = vdwg.mxu0
        %vm486 = vcmp.eq.s32.totalorder %v251, 9
        %vm487 = vcmp.eq.s32.totalorder %v252, 9
        %vm488 = vcmp.eq.s32.totalorder %v253, 9
        %vm489 = vcmp.eq.s32.totalorder %v254, 9
        %v490 = vsel %vm486, 1, 0
        %v491 = vsel %vm487, 1, 0
        %v492 = vsel %vm488, 1, 0
        %v493 = vsel %vm489, 1, 0
        %494 = vset.pattern.permute.xlu0 0
        %495 = vperm.xlu0 %494, %v490
        %v496 = vpop.permute.xlu0 %495
        %497 = vset.pattern.permute.xlu0 0
        %498 = vperm.xlu0 %497, %v491
        %v499 = vpop.permute.xlu0 %498
        %500 = vset.pattern.permute.xlu0 0
        %501 = vperm.xlu0 %500, %v492
        %v502 = vpop.permute.xlu0 %501
        %503 = vset.pattern.permute.xlu0 0
        %504 = vperm.xlu0 %503, %v493
        %v505 = vpop.permute.xlu0 %504
        %vm506 = vcmp.eq.s32.totalorder %v496, 1
        %vm507 = vcmp.eq.s32.totalorder %v499, 1
        %vm508 = vcmp.eq.s32.totalorder %v502, 1
        %vm509 = vcmp.eq.s32.totalorder %v505, 1
        %v510 = vsel %vm506, 0.0, %v342
        %v511 = vsel %vm507, 0.0, %v347
        %v512 = vsel %vm508, 0.0, %v352
        %v513 = vsel %vm509, 0.0, %v357
        %v514 = vadd.f32 %v510, %v468
        %v515 = vadd.f32 %v511, %v473
        %v516 = vadd.f32 %v512, %v478
        %v517 = vadd.f32 %v513, %v483
        %518 = vst [vmem:[%s237] sm:$0xff] %v514
        %519 = vst [vmem:[%s237 + $0x8] sm:$0xff] %v515
        %520 = vst [vmem:[%s237 + $0x10] sm:$0xff] %v516
        %521 = vst [vmem:[%s237 + $0x18] sm:$0xff] %v517
        %s522 = sand.u32 %s122, 1
        %s523 = scalar_lea.sflag [#allocation4], %s522
        %s524 = sand.u32 %s122, 1
        %s525 = smul.addr %s524, 32
        %s526 = scalar_lea.vmem [#allocation7], %s525
        // Predicated region
        $region45: #{tpu_custom_call.1} parent=35 // pred_check
          %p527 = pneg %p132
        $region46: #{tpu_custom_call.1} parent=35 // pred_check_branch
          %529 = sbr.rel (%p527) target = $region48
        $region47: #{tpu_custom_call.1} parent=35 // pred_region
          %s530 = smul.u32 4, %s20
          %s532 = ssub.s32 512, 512
          %533 = vsyncadd %s523, %s532
          %s534 = smul.addr %s530, 128
          %s535 = scalar_lea.hbm %s4, %s534
          %s536 = sshll.u32 %s526, 4
          %s537 = int_to_ptr.vmem [resolvable:$true] %s536
          %542 = dma.vmem_to_hbm [thread:$0]  %s537, 512, %s535, %s523, 128, 128, 8
        $region48: #{tpu_custom_call.1} parent=35 // pred_fallthru
          _
      $region36: #{tpu_custom_call.1} parent=5 // pred_fallthru
        _
      %p543 = scmp.le.s32.totalorder 2, %s15
      // Predicated region
      $region49: #{tpu_custom_call.1} parent=5 // pred_check
        %p544 = pneg %p543
      $region50: #{tpu_custom_call.1} parent=5 // pred_check_branch
        %546 = sbr.rel (%p544) target = $region52
      $region51: #{tpu_custom_call.1} parent=5 // pred_region
        %s547 = ssub.s32 %s15, 2
        // Predicated region
        $region53: #{tpu_custom_call.1} parent=51 // pred_check
          %p548 = pneg %p138
        $region54: #{tpu_custom_call.1} parent=51 // pred_check_branch
          %550 = sbr.rel (%p548) target = $region56
        $region55: #{tpu_custom_call.1} parent=51 // pred_region
          %s551 = sand.u32 %s123, 1
          %s552 = scalar_lea.sflag [#allocation4], %s551
          %s553 = sand.u32 %s123, 1
          %s554 = smul.addr %s553, 32
          %s555 = scalar_lea.vmem [#allocation7], %s554
          %556 = dma.done %s552, 512
        $region56: #{tpu_custom_call.1} parent=51 // pred_fallthru
          _
      $region52: #{tpu_custom_call.1} parent=5 // pred_fallthru
        _
    $region6: #{tpu_custom_call.1} parent=1 // loop_footer
      %s19 = sadd.s32 1, %s15
    $region7: #{tpu_custom_call.1} parent=1 // loop_footer_branch
      %14 = sbr.rel target = $region3
    $region8: #{tpu_custom_call.1} parent=1 // loop_exit
      _
    %557 = vsyncpa [#allocation3], 1
    %s558 = scalar_lea.sflag [#allocation3], 1
    %559 = vsyncpa %s558, 1
    %560 = vsyncpa [#allocation6], 1
    %561 = vsyncpa [#allocation4], 1
    %s562 = scalar_lea.sflag [#allocation4], 1
    %563 = vsyncpa %s562, 1

</llo_original>
